<compile_context>
chip_gen: v5e
topology: v5e:2x2
jax: 0.10.0
libtpu: 0.0.40
codegen_flags: <defaults>
</compile_context>

<pallas_src>
import jax
import jax.numpy as jnp
from jax import lax
from jax.experimental import pallas as pl
from jax.experimental.pallas import tpu as pltpu

LANE = 128      # lane width  -> pad hidden/output dims to this
SUBLANE = 8     # sublane     -> pad batch to this


def _round_up(x, m):
    return (x + m - 1) // m * m


def _choose_ts(t, bb, hp, budget_bytes=4 * 1024 * 1024):
    """Timesteps per grid step: largest power-of-two divisor of T whose
    double-buffered gate-slab block fits a small VMEM budget."""
    per_step = 2 * bb * 4 * hp * 4          # 2 bufs x (bb, 4Hp) f32 per step
    for ts in (64, 32, 16, 8, 4, 2, 1):
        if ts <= t and t % ts == 0 and ts * per_step <= budget_bytes:
            return ts
    return 1


def _choose_batch_block(bp):
    """Batch rows per grid block: split into 2 sublane-aligned blocks when
    possible so the 'parallel' batch axis can use v7x's second TensorCore."""
    if bp >= 2 * SUBLANE and bp % (2 * SUBLANE) == 0:
        return bp // 2
    return bp


# ---------------------------------------------------------------------------
# Fused kernel: all LSTM layers + fc
# ---------------------------------------------------------------------------
def _make_fused_kernel(num_layers, hp):
    """Builds the fused kernel for a static number of layers.

    Ref order (num_layers > 1):
      g1_ref   (TS, BB, 4Hp) f32   layer-1 x @ W_ih1^T (time-major, no bias)
      b1_ref   (1, 4Hp)      f32   layer-1 bias (b_ih + b_hh)
      whh_ref  (N, Hp, 4Hp)  bf16  W_hh^T for all layers
      wih_ref  (N-1, Hp, 4Hp)bf16  W_ih^T for layers 2..N
      brest_ref(N-1, 1, 4Hp) f32   biases for layers 2..N
      fcw_ref  (Hp, Op)      bf16  fc weight^T
      fcb_ref  (1, Op)       f32   fc bias
      out_ref  (BB, Op)      f32   fc output (written once, at last timestep)
      h_sc/c_sc(N, BB, Hp)   f32   recurrent state, persists across grid steps
    """
    bf = jnp.bfloat16

    def kernel(g1_ref, b1_ref, whh_ref, *rest):
        if num_layers > 1:
            wih_ref, brest_ref, fcw_ref, fcb_ref, out_ref, h_sc, c_sc = rest
        else:
            fcw_ref, fcb_ref, out_ref, h_sc, c_sc = rest
            wih_ref = brest_ref = None

        ti = pl.program_id(1)

        @pl.when(ti == 0)
        def _():
            h_sc[...] = jnp.zeros_like(h_sc)   # h0 = 0
            c_sc[...] = jnp.zeros_like(c_sc)   # c0 = 0

        ts = g1_ref.shape[0]

        def cell(gates, c_prev):
            # PyTorch gate order: input, forget, cell(g), output (lane-aligned)
            i_g = jax.nn.sigmoid(gates[:, 0 * hp:1 * hp])
            f_g = jax.nn.sigmoid(gates[:, 1 * hp:2 * hp])
            g_g = jnp.tanh(gates[:, 2 * hp:3 * hp])
            o_g = jax.nn.sigmoid(gates[:, 3 * hp:4 * hp])
            c_new = f_g * c_prev + i_g * g_g
            h_new = o_g * jnp.tanh(c_new)
            return h_new, c_new

        def step(i, carry):
            hs, cs = carry
            inp = g1_ref[i] + b1_ref[...]                  # (BB, 4Hp) f32
            new_hs, new_cs = [], []
            for l in range(num_layers):
                gates = inp + jnp.dot(hs[l].astype(bf), whh_ref[l],
                                      preferred_element_type=jnp.float32)
                h_n, c_n = cell(gates, cs[l])
                new_hs.append(h_n)
                new_cs.append(c_n)
                if l + 1 < num_layers:
                    # Next layer's input projection, computed in-kernel:
                    # no inter-layer activation ever hits HBM.
                    inp = brest_ref[l] + jnp.dot(h_n.astype(bf), wih_ref[l],
                                                 preferred_element_type=jnp.float32)
            return tuple(new_hs), tuple(new_cs)

        hs0 = tuple(h_sc[l] for l in range(num_layers))
        cs0 = tuple(c_sc[l] for l in range(num_layers))
        hs, cs = lax.fori_loop(0, ts, step, (hs0, cs0))

        for l in range(num_layers):
            h_sc[l] = hs[l]
            c_sc[l] = cs[l]

        @pl.when(ti == pl.num_programs(1) - 1)
        def _():
            # fc(lstm_out[:, -1, :]) fused at the final timestep; the last
            # layer's (T,B,H) sequence is never materialized.
            out_ref[...] = (
                jnp.dot(hs[-1].astype(bf), fcw_ref[...],
                        preferred_element_type=jnp.float32)
                + fcb_ref[...]
            ).astype(out_ref.dtype)

    return kernel


# ---------------------------------------------------------------------------
# Parameter preparation (pad + transpose + cast ONCE, outside the forward)
# ---------------------------------------------------------------------------
def prepare_params(raw, hidden_dim, output_dim):
    h = hidden_dim
    hp = _round_up(h, LANE)
    op = _round_up(output_dim, LANE)

    def pad_gate_rows(w):                       # (4H, X) -> (4Hp, X), per gate
        x = w.shape[1]
        w4 = w.reshape(4, h, x)
        w4 = jnp.pad(w4, ((0, 0), (0, hp - h), (0, 0)))
        return w4.reshape(4 * hp, x)

    def pad_gate_vec(v):                        # (4H,) -> (4Hp,), per gate
        v4 = jnp.pad(v.reshape(4, h), ((0, 0), (0, hp - h)))
        return v4.reshape(4 * hp)

    layers = raw["lstm"]
    n = len(layers)

    # Layer 1: input projection stays in XLA (one big matmul over all t).
    w_ih1 = pad_gate_rows(layers[0]["w_ih"]).astype(jnp.bfloat16)       # (4Hp, D)
    b1 = pad_gate_vec(layers[0]["b_ih"] + layers[0]["b_hh"]
                      ).astype(jnp.float32).reshape(1, 4 * hp)

    # Recurrent weights for all layers, transposed for h @ W_hh^T.
    whh_all = jnp.stack([
        jnp.pad(pad_gate_rows(l["w_hh"]), ((0, 0), (0, hp - h))).T       # (Hp, 4Hp)
        for l in layers
    ]).astype(jnp.bfloat16)                                              # (N, Hp, 4Hp)

    if n > 1:
        wih_rest = jnp.stack([
            jnp.pad(pad_gate_rows(l["w_ih"]), ((0, 0), (0, hp - h))).T   # (Hp, 4Hp)
            for l in layers[1:]
        ]).astype(jnp.bfloat16)                                          # (N-1, Hp, 4Hp)
        b_rest = jnp.stack([
            pad_gate_vec(l["b_ih"] + l["b_hh"]).reshape(1, 4 * hp)
            for l in layers[1:]
        ]).astype(jnp.float32)                                           # (N-1, 1, 4Hp)
    else:
        wih_rest = None
        b_rest = None

    fc_w_p = jnp.pad(raw["fc_w"], ((0, op - output_dim), (0, hp - h)))
    fc_b_p = jnp.pad(raw["fc_b"], ((0, op - output_dim),))
    return dict(
        num_layers=n, hidden_pad=hp, out_pad=op, out_dim=output_dim,
        w_ih1=w_ih1, b1=b1, whh_all=whh_all, wih_rest=wih_rest, b_rest=b_rest,
        fc_w_t=fc_w_p.T.astype(jnp.bfloat16),                            # (Hp, Op)
        fc_b=fc_b_p.astype(jnp.float32).reshape(1, op),
    )


# ---------------------------------------------------------------------------
# Forward pass (== LSTMModel.forward in eval mode)
# ---------------------------------------------------------------------------
def lstm_model_forward(x_btd, prep):
    b, t, d = x_btd.shape
    bp = _round_up(b, SUBLANE)
    hp, op = prep["hidden_pad"], prep["out_pad"]
    n = prep["num_layers"]
    g4 = 4 * hp

    x = jnp.pad(x_btd, ((0, bp - b), (0, 0), (0, 0)))                    # pad batch

    # Hoisted layer-1 input projection over ALL timesteps (one big MXU matmul,
    # time-major output so the kernel indexes the untiled leading time axis).
    # Bias is folded inside the kernel, so this stays a single fused op.
    g1 = jnp.einsum("btd,gd->tbg", x.astype(jnp.bfloat16), prep["w_ih1"],
                    preferred_element_type=jnp.float32)                  # (T, Bp, 4Hp)

    bb = _choose_batch_block(bp)
    ts = _choose_ts(t, bb, hp)
    nb, nt = bp // bb, t // ts

    const2 = lambda bi, ti: (0, 0)
    const3 = lambda bi, ti: (0, 0, 0)

    in_specs = [
        pl.BlockSpec((ts, bb, g4), lambda bi, ti: (ti, bi, 0)),          # gate slab
        pl.BlockSpec((1, g4), const2),                                   # b1
        pl.BlockSpec((n, hp, g4), const3),                               # W_hh^T all
    ]
    args = [g1, prep["b1"], prep["whh_all"]]
    if n > 1:
        in_specs += [
            pl.BlockSpec((n - 1, hp, g4), const3),                       # W_ih^T 2..N
            pl.BlockSpec((n - 1, 1, g4), const3),                        # bias  2..N
        ]
        args += [prep["wih_rest"], prep["b_rest"]]
    in_specs += [
        pl.BlockSpec((hp, op), const2),                                  # fc W^T
        pl.BlockSpec((1, op), const2),                                   # fc b
    ]
    args += [prep["fc_w_t"], prep["fc_b"]]

    out_pad = pl.pallas_call(
        _make_fused_kernel(n, hp),
        out_shape=jax.ShapeDtypeStruct((bp, op), jnp.float32),
        grid_spec=pltpu.PrefetchScalarGridSpec(
            num_scalar_prefetch=0,
            grid=(nb, nt),                       # batch-parallel, time-serial
            in_specs=in_specs,
            out_specs=pl.BlockSpec((bb, op), lambda bi, ti: (bi, 0)),
            scratch_shapes=[
                pltpu.VMEM((n, bb, hp), jnp.float32),   # h state (all layers)
                pltpu.VMEM((n, bb, hp), jnp.float32),   # c state (all layers)
            ],
        ),
        compiler_params=pltpu.CompilerParams(
            dimension_semantics=("parallel", "arbitrary"),
            vmem_limit_bytes=32 * 1024 * 1024,
        ),
    )(*args)

    # TODO(synk): inter-layer dropout is train-mode only in PyTorch; the eval
    # forward pass has no dropout, so none is applied here.
    return out_pad[:b, :prep["out_dim"]]


# ---------------------------------------------------------------------------
# PyTorch-style deterministic parameter init: U(-1/sqrt(H), 1/sqrt(H))
# ---------------------------------------------------------------------------
def init_params(key, input_dim, hidden_dim, num_layers, output_dim):
    k = 1.0 / jnp.sqrt(hidden_dim)
    params = {"lstm": []}
    for layer in range(num_layers):
        in_dim = input_dim if layer == 0 else hidden_dim
        key, k1, k2, k3, k4 = jax.random.split(key, 5)
        params["lstm"].append({
            "w_ih": jax.random.uniform(k1, (4 * hidden_dim, in_dim),
                                       jnp.float32, -k, k),
            "w_hh": jax.random.uniform(k2, (4 * hidden_dim, hidden_dim),
                                       jnp.float32, -k, k),
            "b_ih": jax.random.uniform(k3, (4 * hidden_dim,),
                                       jnp.float32, -k, k),
            "b_hh": jax.random.uniform(k4, (4 * hidden_dim,),
                                       jnp.float32, -k, k),
        })
    key, k5, k6 = jax.random.split(key, 3)
    params["fc_w"] = jax.random.uniform(k5, (output_dim, hidden_dim),
                                        jnp.float32, -k, k)
    params["fc_b"] = jax.random.uniform(k6, (output_dim,),
                                        jnp.float32, -k, k)
    return params


# ---------------------------------------------------------------------------
# Pure-JAX reference mirroring the kernel numerics (bf16 matmul inputs,
# f32 accumulation, f32 gate math) for the correctness check.
# ---------------------------------------------------------------------------
def lstm_model_ref(x_btd, raw):
    bf = jnp.bfloat16
    h = x_btd
    b = x_btd.shape[0]
    for lyr in raw["lstm"]:
        w_ih, w_hh = lyr["w_ih"], lyr["w_hh"]
        bias = lyr["b_ih"] + lyr["b_hh"]
        hd = w_hh.shape[1]

        def step(carry, x_t, w_ih=w_ih, w_hh=w_hh, bias=bias, hd=hd):
            hp_, cp = carry
            gates = (jnp.dot(x_t.astype(bf), w_ih.T.astype(bf),
                             preferred_element_type=jnp.float32)
                     + jnp.dot(hp_.astype(bf), w_hh.T.astype(bf),
                               preferred_element_type=jnp.float32)
                     + bias)
            i = jax.nn.sigmoid(gates[:, :hd])
            f = jax.nn.sigmoid(gates[:, hd:2 * hd])
            g = jnp.tanh(gates[:, 2 * hd:3 * hd])
            o = jax.nn.sigmoid(gates[:, 3 * hd:])
            c = f * cp + i * g
            hn = o * jnp.tanh(c)
            return (hn, c), hn

        init = (jnp.zeros((b, hd), jnp.float32), jnp.zeros((b, hd), jnp.float32))
        _, hs = jax.lax.scan(step, init, jnp.transpose(h, (1, 0, 2)))
        h = jnp.transpose(hs, (1, 0, 2))
    h_last = h[:, -1, :]
    return (jnp.dot(h_last.astype(bf), raw["fc_w"].T.astype(bf),
                    preferred_element_type=jnp.float32) + raw["fc_b"])


# ---------------------------------------------------------------------------
if __name__ == "__main__":
    INPUT_DIM, HIDDEN_DIM, NUM_LAYERS, OUTPUT_DIM = 8, 32, 2, 4
    BATCH, SEQ = 4, 8

    key = jax.random.PRNGKey(0)
    key, pkey, xkey = jax.random.split(key, 3)
    raw_params = init_params(pkey, INPUT_DIM, HIDDEN_DIM, NUM_LAYERS, OUTPUT_DIM)
    prep_params = prepare_params(raw_params, HIDDEN_DIM, OUTPUT_DIM)
    x = jax.random.normal(xkey, (BATCH, SEQ, INPUT_DIM), jnp.float32)

    out = jax.block_until_ready(lstm_model_forward(x, prep_params))
    ref = jax.block_until_ready(lstm_model_ref(x, raw_params))

    assert out.shape == (BATCH, OUTPUT_DIM), out.shape
    assert jnp.allclose(out, ref, atol=2e-3, rtol=2e-3), (out, ref)

    print("KERNEL_OK")
</pallas_src>

<mosaic_0001>
module attributes {stable_mosaic.version = 11 : i64} {
  func.func @kernel(%arg0: i32, %arg1: i32, %arg2: memref<8x8x512xf32, #tpu.memory_space<vmem>>, %arg3: memref<1x512xf32, #tpu.memory_space<vmem>>, %arg4: memref<2x128x512xbf16, #tpu.memory_space<vmem>>, %arg5: memref<1x128x512xbf16, #tpu.memory_space<vmem>>, %arg6: memref<1x1x512xf32, #tpu.memory_space<vmem>>, %arg7: memref<128x128xbf16, #tpu.memory_space<vmem>>, %arg8: memref<1x128xf32, #tpu.memory_space<vmem>>, %arg9: memref<8x128xf32, #tpu.memory_space<vmem>>, %arg10: memref<2x8x128xf32, #tpu.memory_space<vmem>>, %arg11: memref<2x8x128xf32, #tpu.memory_space<vmem>>) attributes {dimension_semantics = [#tpu.dimension_semantics<parallel>, #tpu.dimension_semantics<arbitrary>], iteration_bounds = array<i64: 1, 1>, scalar_prefetch = 0 : i64, scratch_operands = 2 : i64, tpu.core_type = #tpu.core_type<tc>, window_params = [{transform_indices = @transform_0, window_bounds = array<i64: 8, 8, 512>}, {pipeline_mode = #tpu.pipeline_mode<synchronous>, transform_indices = @transform_1, window_bounds = array<i64: 1, 512>}, {pipeline_mode = #tpu.pipeline_mode<synchronous>, transform_indices = @transform_2, window_bounds = array<i64: 2, 128, 512>}, {pipeline_mode = #tpu.pipeline_mode<synchronous>, transform_indices = @transform_3, window_bounds = array<i64: 1, 128, 512>}, {pipeline_mode = #tpu.pipeline_mode<synchronous>, transform_indices = @transform_4, window_bounds = array<i64: 1, 1, 512>}, {pipeline_mode = #tpu.pipeline_mode<synchronous>, transform_indices = @transform_5, window_bounds = array<i64: 128, 128>}, {pipeline_mode = #tpu.pipeline_mode<synchronous>, transform_indices = @transform_6, window_bounds = array<i64: 1, 128>}, {transform_indices = @transform_7, window_bounds = array<i64: 8, 128>}]} {
    %c0_i32 = arith.constant 0 : i32
    %0 = arith.cmpi eq, %arg1, %c0_i32 : i32
    %1 = arith.extui %0 : i1 to i32
    %c0_i32_0 = arith.constant 0 : i32
    %2 = arith.cmpi ne, %1, %c0_i32_0 : i32
    scf.if %2 {
      %cst = arith.constant 0.000000e+00 : f32
      %28 = vector.broadcast %cst : f32 to vector<2x8x128xf32>
      %c0_27 = arith.constant 0 : index
      %c0_28 = arith.constant 0 : index
      %c0_29 = arith.constant 0 : index
      %29 = vector.load %arg10[%c0_27, %c0_28, %c0_29] : memref<2x8x128xf32, #tpu.memory_space<vmem>>, vector<2x8x128xf32>
      tpu.vector_store %arg10[%c0_27, %c0_28, %c0_29], %28 {strides = array<i32>} : memref<2x8x128xf32, #tpu.memory_space<vmem>>, vector<2x8x128xf32>,
      %cst_30 = arith.constant 0.000000e+00 : f32
      %30 = vector.broadcast %cst_30 : f32 to vector<2x8x128xf32>
      %c0_31 = arith.constant 0 : index
      %c0_32 = arith.constant 0 : index
      %c0_33 = arith.constant 0 : index
      %31 = vector.load %arg11[%c0_31, %c0_32, %c0_33] : memref<2x8x128xf32, #tpu.memory_space<vmem>>, vector<2x8x128xf32>
      tpu.vector_store %arg11[%c0_31, %c0_32, %c0_33], %30 {strides = array<i32>} : memref<2x8x128xf32, #tpu.memory_space<vmem>>, vector<2x8x128xf32>,
    } else {
    }
    %c0 = arith.constant 0 : index
    %c0_1 = arith.constant 0 : index
    %c0_2 = arith.constant 0 : index
    %3 = vector.load %arg10[%c0, %c0_1, %c0_2] : memref<2x8x128xf32, #tpu.memory_space<vmem>>, vector<1x8x128xf32>
    %4 = vector.shape_cast %3 : vector<1x8x128xf32> to vector<8x128xf32>
    %c1 = arith.constant 1 : index
    %c0_3 = arith.constant 0 : index
    %c0_4 = arith.constant 0 : index
    %5 = vector.load %arg10[%c1, %c0_3, %c0_4] : memref<2x8x128xf32, #tpu.memory_space<vmem>>, vector<1x8x128xf32>
    %6 = vector.shape_cast %5 : vector<1x8x128xf32> to vector<8x128xf32>
    %c0_5 = arith.constant 0 : index
    %c0_6 = arith.constant 0 : index
    %c0_7 = arith.constant 0 : index
    %7 = vector.load %arg11[%c0_5, %c0_6, %c0_7] : memref<2x8x128xf32, #tpu.memory_space<vmem>>, vector<1x8x128xf32>
    %8 = vector.shape_cast %7 : vector<1x8x128xf32> to vector<8x128xf32>
    %c1_8 = arith.constant 1 : index
    %c0_9 = arith.constant 0 : index
    %c0_10 = arith.constant 0 : index
    %9 = vector.load %arg11[%c1_8, %c0_9, %c0_10] : memref<2x8x128xf32, #tpu.memory_space<vmem>>, vector<1x8x128xf32>
    %10 = vector.shape_cast %9 : vector<1x8x128xf32> to vector<8x128xf32>
    %c0_i32_11 = arith.constant 0 : i32
    %c8_i32 = arith.constant 8 : i32
    %11 = arith.addi %c0_i32_11, %c8_i32 : i32
    %c1_i32 = arith.constant 1 : i32
    %12:4 = scf.for %arg12 = %c0_i32_11 to %11 step %c1_i32 iter_args(%arg13 = %4, %arg14 = %6, %arg15 = %8, %arg16 = %10) -> (vector<8x128xf32>, vector<8x128xf32>, vector<8x128xf32>, vector<8x128xf32>)  : i32 {
      %28 = arith.index_cast %arg12 : i32 to index
      %c0_27 = arith.constant 0 : index
      %c0_28 = arith.constant 0 : index
      %29 = vector.load %arg2[%28, %c0_27, %c0_28] : memref<8x8x512xf32, #tpu.memory_space<vmem>>, vector<1x8x512xf32>
      %30 = vector.shape_cast %29 : vector<1x8x512xf32> to vector<8x512xf32>
      %c0_29 = arith.constant 0 : index
      %c0_30 = arith.constant 0 : index
      %31 = vector.load %arg3[%c0_29, %c0_30] : memref<1x512xf32, #tpu.memory_space<vmem>>, vector<1x512xf32>
      %32 = vector.broadcast %31 : vector<1x512xf32> to vector<8x512xf32>
      %33 = arith.addf %30, %32 : vector<8x512xf32>
      %34 = arith.truncf %arg13 : vector<8x128xf32> to vector<8x128xbf16>
      %c0_31 = arith.constant 0 : index
      %c0_32 = arith.constant 0 : index
      %c0_33 = arith.constant 0 : index
      %35 = vector.load %arg4[%c0_31, %c0_32, %c0_33] : memref<2x128x512xbf16, #tpu.memory_space<vmem>>, vector<1x128x512xbf16>
      %36 = vector.shape_cast %35 : vector<1x128x512xbf16> to vector<128x512xbf16>
      %cst = arith.constant dense<0.000000e+00> : vector<8x512xf32>
      %37 = tpu.matmul %34, %36, %cst {dimension_numbers = #tpu.dot_dimension_numbers<[1], [0], [0], [1], [0, 0, 1, 1], [], []>} : vector<8x128xbf16>, vector<128x512xbf16>, vector<8x512xf32> -> vector<8x512xf32>
      %38 = arith.addf %33, %37 : vector<8x512xf32>
      %39 = vector.extract_strided_slice %38 {offsets = [0, 0], sizes = [8, 128], strides = [1, 1]} : vector<8x512xf32> to vector<8x128xf32>
      %40 = arith.negf %39 : vector<8x128xf32>
      %41 = math.exp %40 : vector<8x128xf32>
      %cst_34 = arith.constant 1.000000e+00 : f32
      %42 = vector.broadcast %cst_34 : f32 to vector<8x128xf32>
      %43 = arith.addf %42, %41 : vector<8x128xf32>
      %44 = arith.divf %42, %43 : vector<8x128xf32>
      %45 = vector.extract_strided_slice %38 {offsets = [0, 128], sizes = [8, 128], strides = [1, 1]} : vector<8x512xf32> to vector<8x128xf32>
      %46 = arith.negf %45 : vector<8x128xf32>
      %47 = math.exp %46 : vector<8x128xf32>
      %cst_35 = arith.constant 1.000000e+00 : f32
      %48 = vector.broadcast %cst_35 : f32 to vector<8x128xf32>
      %49 = arith.addf %48, %47 : vector<8x128xf32>
      %50 = arith.divf %48, %49 : vector<8x128xf32>
      %51 = vector.extract_strided_slice %38 {offsets = [0, 256], sizes = [8, 128], strides = [1, 1]} : vector<8x512xf32> to vector<8x128xf32>
      %52 = math.tanh %51 : vector<8x128xf32>
      %53 = vector.extract_strided_slice %38 {offsets = [0, 384], sizes = [8, 128], strides = [1, 1]} : vector<8x512xf32> to vector<8x128xf32>
      %54 = arith.negf %53 : vector<8x128xf32>
      %55 = math.exp %54 : vector<8x128xf32>
      %cst_36 = arith.constant 1.000000e+00 : f32
      %56 = vector.broadcast %cst_36 : f32 to vector<8x128xf32>
      %57 = arith.addf %56, %55 : vector<8x128xf32>
      %58 = arith.divf %56, %57 : vector<8x128xf32>
      %59 = arith.mulf %50, %arg15 : vector<8x128xf32>
      %60 = arith.mulf %44, %52 : vector<8x128xf32>
      %61 = arith.addf %59, %60 : vector<8x128xf32>
      %62 = math.tanh %61 : vector<8x128xf32>
      %63 = arith.mulf %58, %62 : vector<8x128xf32>
      %c0_37 = arith.constant 0 : index
      %c0_38 = arith.constant 0 : index
      %c0_39 = arith.constant 0 : index
      %64 = vector.load %arg6[%c0_37, %c0_38, %c0_39] : memref<1x1x512xf32, #tpu.memory_space<vmem>>, vector<1x1x512xf32>
      %65 = vector.shape_cast %64 : vector<1x1x512xf32> to vector<1x512xf32>
      %66 = arith.truncf %63 : vector<8x128xf32> to vector<8x128xbf16>
      %c0_40 = arith.constant 0 : index
      %c0_41 = arith.constant 0 : index
      %c0_42 = arith.constant 0 : index
      %67 = vector.load %arg5[%c0_40, %c0_41, %c0_42] : memref<1x128x512xbf16, #tpu.memory_space<vmem>>, vector<1x128x512xbf16>
      %68 = vector.shape_cast %67 : vector<1x128x512xbf16> to vector<128x512xbf16>
      %cst_43 = arith.constant dense<0.000000e+00> : vector<8x512xf32>
      %69 = tpu.matmul %66, %68, %cst_43 {dimension_numbers = #tpu.dot_dimension_numbers<[1], [0], [0], [1], [0, 0, 1, 1], [], []>} : vector<8x128xbf16>, vector<128x512xbf16>, vector<8x512xf32> -> vector<8x512xf32>
      %70 = vector.broadcast %65 : vector<1x512xf32> to vector<8x512xf32>
      %71 = arith.addf %70, %69 : vector<8x512xf32>
      %72 = arith.truncf %arg14 : vector<8x128xf32> to vector<8x128xbf16>
      %c1_44 = arith.constant 1 : index
      %c0_45 = arith.constant 0 : index
      %c0_46 = arith.constant 0 : index
      %73 = vector.load %arg4[%c1_44, %c0_45, %c0_46] : memref<2x128x512xbf16, #tpu.memory_space<vmem>>, vector<1x128x512xbf16>
      %74 = vector.shape_cast %73 : vector<1x128x512xbf16> to vector<128x512xbf16>
      %cst_47 = arith.constant dense<0.000000e+00> : vector<8x512xf32>
      %75 = tpu.matmul %72, %74, %cst_47 {dimension_numbers = #tpu.dot_dimension_numbers<[1], [0], [0], [1], [0, 0, 1, 1], [], []>} : vector<8x128xbf16>, vector<128x512xbf16>, vector<8x512xf32> -> vector<8x512xf32>
      %76 = arith.addf %71, %75 : vector<8x512xf32>
      %77 = vector.extract_strided_slice %76 {offsets = [0, 0], sizes = [8, 128], strides = [1, 1]} : vector<8x512xf32> to vector<8x128xf32>
      %78 = arith.negf %77 : vector<8x128xf32>
      %79 = math.exp %78 : vector<8x128xf32>
      %cst_48 = arith.constant 1.000000e+00 : f32
      %80 = vector.broadcast %cst_48 : f32 to vector<8x128xf32>
      %81 = arith.addf %80, %79 : vector<8x128xf32>
      %82 = arith.divf %80, %81 : vector<8x128xf32>
      %83 = vector.extract_strided_slice %76 {offsets = [0, 128], sizes = [8, 128], strides = [1, 1]} : vector<8x512xf32> to vector<8x128xf32>
      %84 = arith.negf %83 : vector<8x128xf32>
      %85 = math.exp %84 : vector<8x128xf32>
      %cst_49 = arith.constant 1.000000e+00 : f32
      %86 = vector.broadcast %cst_49 : f32 to vector<8x128xf32>
      %87 = arith.addf %86, %85 : vector<8x128xf32>
      %88 = arith.divf %86, %87 : vector<8x128xf32>
      %89 = vector.extract_strided_slice %76 {offsets = [0, 256], sizes = [8, 128], strides = [1, 1]} : vector<8x512xf32> to vector<8x128xf32>
      %90 = math.tanh %89 : vector<8x128xf32>
      %91 = vector.extract_strided_slice %76 {offsets = [0, 384], sizes = [8, 128], strides = [1, 1]} : vector<8x512xf32> to vector<8x128xf32>
      %92 = arith.negf %91 : vector<8x128xf32>
      %93 = math.exp %92 : vector<8x128xf32>
      %cst_50 = arith.constant 1.000000e+00 : f32
      %94 = vector.broadcast %cst_50 : f32 to vector<8x128xf32>
      %95 = arith.addf %94, %93 : vector<8x128xf32>
      %96 = arith.divf %94, %95 : vector<8x128xf32>
      %97 = arith.mulf %88, %arg16 : vector<8x128xf32>
      %98 = arith.mulf %82, %90 : vector<8x128xf32>
      %99 = arith.addf %97, %98 : vector<8x128xf32>
      %100 = math.tanh %99 : vector<8x128xf32>
      %101 = arith.mulf %96, %100 : vector<8x128xf32>
      scf.yield %63, %101, %61, %99 : vector<8x128xf32>, vector<8x128xf32>, vector<8x128xf32>, vector<8x128xf32>
    }
    %c8_i32_12 = arith.constant 8 : i32
    %c0_13 = arith.constant 0 : index
    %c0_14 = arith.constant 0 : index
    %c0_15 = arith.constant 0 : index
    %13 = vector.load %arg10[%c0_13, %c0_14, %c0_15] : memref<2x8x128xf32, #tpu.memory_space<vmem>>, vector<1x8x128xf32>
    %14 = vector.shape_cast %13 : vector<1x8x128xf32> to vector<8x128xf32>
    %15 = vector.shape_cast %12#0 : vector<8x128xf32> to vector<1x8x128xf32>
    tpu.vector_store %arg10[%c0_13, %c0_14, %c0_15], %15 {strides = array<i32>} : memref<2x8x128xf32, #tpu.memory_space<vmem>>, vector<1x8x128xf32>,
    %c0_16 = arith.constant 0 : index
    %c0_17 = arith.constant 0 : index
    %c0_18 = arith.constant 0 : index
    %16 = vector.load %arg11[%c0_16, %c0_17, %c0_18] : memref<2x8x128xf32, #tpu.memory_space<vmem>>, vector<1x8x128xf32>
    %17 = vector.shape_cast %16 : vector<1x8x128xf32> to vector<8x128xf32>
    %18 = vector.shape_cast %12#2 : vector<8x128xf32> to vector<1x8x128xf32>
    tpu.vector_store %arg11[%c0_16, %c0_17, %c0_18], %18 {strides = array<i32>} : memref<2x8x128xf32, #tpu.memory_space<vmem>>, vector<1x8x128xf32>,
    %c1_19 = arith.constant 1 : index
    %c0_20 = arith.constant 0 : index
    %c0_21 = arith.constant 0 : index
    %19 = vector.load %arg10[%c1_19, %c0_20, %c0_21] : memref<2x8x128xf32, #tpu.memory_space<vmem>>, vector<1x8x128xf32>
    %20 = vector.shape_cast %19 : vector<1x8x128xf32> to vector<8x128xf32>
    %21 = vector.shape_cast %12#1 : vector<8x128xf32> to vector<1x8x128xf32>
    tpu.vector_store %arg10[%c1_19, %c0_20, %c0_21], %21 {strides = array<i32>} : memref<2x8x128xf32, #tpu.memory_space<vmem>>, vector<1x8x128xf32>,
    %c1_22 = arith.constant 1 : index
    %c0_23 = arith.constant 0 : index
    %c0_24 = arith.constant 0 : index
    %22 = vector.load %arg11[%c1_22, %c0_23, %c0_24] : memref<2x8x128xf32, #tpu.memory_space<vmem>>, vector<1x8x128xf32>
    %23 = vector.shape_cast %22 : vector<1x8x128xf32> to vector<8x128xf32>
    %24 = vector.shape_cast %12#3 : vector<8x128xf32> to vector<1x8x128xf32>
    tpu.vector_store %arg11[%c1_22, %c0_23, %c0_24], %24 {strides = array<i32>} : memref<2x8x128xf32, #tpu.memory_space<vmem>>, vector<1x8x128xf32>,
    %c0_i32_25 = arith.constant 0 : i32
    %25 = arith.cmpi eq, %arg1, %c0_i32_25 : i32
    %26 = arith.extui %25 : i1 to i32
    %c0_i32_26 = arith.constant 0 : i32
    %27 = arith.cmpi ne, %26, %c0_i32_26 : i32
    scf.if %27 {
      %28 = arith.truncf %12#1 : vector<8x128xf32> to vector<8x128xbf16>
      %c0_27 = arith.constant 0 : index
      %c0_28 = arith.constant 0 : index
      %29 = vector.load %arg7[%c0_27, %c0_28] : memref<128x128xbf16, #tpu.memory_space<vmem>>, vector<128x128xbf16>
      %cst = arith.constant dense<0.000000e+00> : vector<8x128xf32>
      %30 = tpu.matmul %28, %29, %cst {dimension_numbers = #tpu.dot_dimension_numbers<[1], [0], [0], [1], [0, 0, 1, 1], [], []>} : vector<8x128xbf16>, vector<128x128xbf16>, vector<8x128xf32> -> vector<8x128xf32>
      %c0_29 = arith.constant 0 : index
      %c0_30 = arith.constant 0 : index
      %31 = vector.load %arg8[%c0_29, %c0_30] : memref<1x128xf32, #tpu.memory_space<vmem>>, vector<1x128xf32>
      %32 = vector.broadcast %31 : vector<1x128xf32> to vector<8x128xf32>
      %33 = arith.addf %30, %32 : vector<8x128xf32>
      %c0_31 = arith.constant 0 : index
      %c0_32 = arith.constant 0 : index
      %34 = vector.load %arg9[%c0_31, %c0_32] : memref<8x128xf32, #tpu.memory_space<vmem>>, vector<8x128xf32>
      tpu.vector_store %arg9[%c0_31, %c0_32], %33 {strides = array<i32>} : memref<8x128xf32, #tpu.memory_space<vmem>>, vector<8x128xf32>,
    } else {
    }
    return
  }
  func.func @transform_0(%arg0: i32, %arg1: i32) -> (i32, i32, i32) {
    %c0_i32 = arith.constant 0 : i32
    %c0_i32_0 = arith.constant 0 : i32
    return %arg1, %arg0, %c0_i32 : i32, i32, i32
  }
  func.func @transform_1(%arg0: i32, %arg1: i32) -> (i32, i32) {
    %c0_i32 = arith.constant 0 : i32
    %c0_i32_0 = arith.constant 0 : i32
    %c0_i32_1 = arith.constant 0 : i32
    return %c0_i32, %c0_i32_0 : i32, i32
  }
  func.func @transform_2(%arg0: i32, %arg1: i32) -> (i32, i32, i32) {
    %c0_i32 = arith.constant 0 : i32
    %c0_i32_0 = arith.constant 0 : i32
    %c0_i32_1 = arith.constant 0 : i32
    %c0_i32_2 = arith.constant 0 : i32
    return %c0_i32, %c0_i32_0, %c0_i32_1 : i32, i32, i32
  }
  func.func @transform_3(%arg0: i32, %arg1: i32) -> (i32, i32, i32) {
    %c0_i32 = arith.constant 0 : i32
    %c0_i32_0 = arith.constant 0 : i32
    %c0_i32_1 = arith.constant 0 : i32
    %c0_i32_2 = arith.constant 0 : i32
    return %c0_i32, %c0_i32_0, %c0_i32_1 : i32, i32, i32
  }
  func.func @transform_4(%arg0: i32, %arg1: i32) -> (i32, i32, i32) {
    %c0_i32 = arith.constant 0 : i32
    %c0_i32_0 = arith.constant 0 : i32
    %c0_i32_1 = arith.constant 0 : i32
    %c0_i32_2 = arith.constant 0 : i32
    return %c0_i32, %c0_i32_0, %c0_i32_1 : i32, i32, i32
  }
  func.func @transform_5(%arg0: i32, %arg1: i32) -> (i32, i32) {
    %c0_i32 = arith.constant 0 : i32
    %c0_i32_0 = arith.constant 0 : i32
    %c0_i32_1 = arith.constant 0 : i32
    return %c0_i32, %c0_i32_0 : i32, i32
  }
  func.func @transform_6(%arg0: i32, %arg1: i32) -> (i32, i32) {
    %c0_i32 = arith.constant 0 : i32
    %c0_i32_0 = arith.constant 0 : i32
    %c0_i32_1 = arith.constant 0 : i32
    return %c0_i32, %c0_i32_0 : i32, i32
  }
  func.func @transform_7(%arg0: i32, %arg1: i32) -> (i32, i32) {
    %c0_i32 = arith.constant 0 : i32
    %c0_i32_0 = arith.constant 0 : i32
    return %arg0, %c0_i32 : i32, i32
  }
}

</mosaic_0001>

<llo_original>
// kernel: tpu_custom_call.1
$region0: #{tpu_custom_call.1}
  #allocation0 [shape = 'u32[]', space=smem, size = 0x4, offset = 0x4, fixed_abs, tag = 'smem constant byte address 0x4 - core index']
  #allocation1 [shape = 'u32[72,128]{1,0:T(1,128)}', space=vmem, size = 0x9000, scoped, tag = 'internal scratch']
  #allocation2 [shape = 'f32[2,8,128]{2,1,0:T(8,128)}', space=vmem, size = 0x2000, scoped, tag = 'scratch operand']
  #allocation3 [shape = 'f32[2,8,128]{2,1,0:T(8,128)}', space=vmem, size = 0x2000, scoped, tag = 'scratch operand']
  %s0 = inlined_call_operand.hbm [shape: f32[8,8,512], index: 0, kind: input, shape index: {}]
  %s1 = inlined_call_operand.hbm [shape: f32[1,512], index: 1, kind: input, shape index: {}]
  %s2 = inlined_call_operand.hbm [shape: bf16[2,128,512], index: 2, kind: input, shape index: {}]
  %s3 = inlined_call_operand.hbm [shape: bf16[1,128,512], index: 3, kind: input, shape index: {}]
  %s4 = inlined_call_operand.hbm [shape: f32[1,1,512], index: 4, kind: input, shape index: {}]
  %s5 = inlined_call_operand.hbm [shape: bf16[128,128], index: 5, kind: input, shape index: {}]
  %s6 = inlined_call_operand.vmem [shape: f32[1,128], index: 6, kind: input, shape index: {}]
  %s7 = inlined_call_operand.hbm [shape: f32[8,128], index: 7, kind: output, shape index: {}]
  %s8 = sld [smem:[#allocation0]]
  $region77: #{tpu_custom_call.1} parent=0
    _
  %s10 = ssub.s32 1, %s8
  %s11 = scalar_select 0, %s10, %s8
  $region1: #{tpu_custom_call.1} parent=0
    #allocation4 [shape = 'u8[131072]{0}', space=vmem, size = 0x20000, scoped, tag = 'input window, operand 0, single buffered']
    #allocation5 [shape = 's32[1]{0}', space=sflag, size = 0x4, scoped, tag = 'scoped memory for tpu_custom_call.1']
    #allocation6 [shape = 's32[1]{0}', space=sflag, size = 0x4, scoped, tag = 'scoped memory for tpu_custom_call.1']
    #allocation7 [shape = 'u8[2048]{0}', space=vmem, size = 0x800, scoped, tag = 'input window, operand 1, single buffered']
    #allocation8 [shape = 's32[1]{0}', space=sflag, size = 0x4, scoped, tag = 'scoped memory for tpu_custom_call.1']
    #allocation9 [shape = 'u8[262144]{0}', space=vmem, size = 0x40000, scoped, tag = 'input window, operand 2, single buffered']
    #allocation10 [shape = 'u8[131072]{0}', space=vmem, size = 0x20000, scoped, tag = 'input window, operand 3, single buffered']
    #allocation11 [shape = 's32[1]{0}', space=sflag, size = 0x4, scoped, tag = 'scoped memory for tpu_custom_call.1']
    #allocation12 [shape = 'u8[2048]{0}', space=vmem, size = 0x800, scoped, tag = 'input window, operand 4, single buffered']
    #allocation13 [shape = 'u8[32768]{0}', space=vmem, size = 0x8000, scoped, tag = 'input window, operand 5, single buffered']
    #allocation14 [shape = 's32[1]{0}', space=sflag, size = 0x4, scoped, tag = 'scoped memory for tpu_custom_call.1']
    #allocation15 [shape = 'u8[4096]{0}', space=vmem, size = 0x1000, scoped, tag = 'output window, operand 0, single buffered']
    %12 = vsyncpa [#allocation5], 0
    %13 = vsyncpa [#allocation8], 0
    %14 = vsyncpa [#allocation11], 0
    %15 = vsyncpa [#allocation14], 0
    %16 = vsyncpa [#allocation6], 0
    // Predicated region
    $region2: #{tpu_custom_call.1} parent=1 // pred_check
      _
    $region3: #{tpu_custom_call.1} parent=1 // pred_check_branch
      %18 = sbr.rel (0) target = $region5
    $region4: #{tpu_custom_call.1} parent=1 // pred_region
      %20 = vsyncadd [#allocation5], 0
      %s21 = sshll.u32 %s0, 4
      %s22 = int_to_ptr.hbm [resolvable:$true] %s21
      %s23 = sshll.u32 [#allocation4], 4
      %s24 = int_to_ptr.vmem [resolvable:$true] %s23
      %29 = dma.hbm_to_vmem [thread:$0]  %s22, 4096, %s24, [#allocation5], 512, 512, 32
    $region5: #{tpu_custom_call.1} parent=1 // pred_fallthru
      _
    // Predicated region
    $region6: #{tpu_custom_call.1} parent=1 // pred_check
      _
    $region7: #{tpu_custom_call.1} parent=1 // pred_check_branch
      %31 = sbr.rel (0) target = $region9
    $region8: #{tpu_custom_call.1} parent=1 // pred_region
      %33 = vsyncadd [#allocation8], 0
      %s35 = sshll.u32 %s1, 4
      %s36 = int_to_ptr.hbm [resolvable:$true] %s35
      %s37 = sshll.u32 [#allocation7], 4
      %s38 = int_to_ptr.vmem [resolvable:$true] %s37
      %40 = dma.hbm_to_vmem [thread:$0]  %s36, 64, %s38, [#allocation8]
    $region9: #{tpu_custom_call.1} parent=1 // pred_fallthru
      _
    // Predicated region
    $region10: #{tpu_custom_call.1} parent=1 // pred_check
      _
    $region11: #{tpu_custom_call.1} parent=1 // pred_check_branch
      %42 = sbr.rel (0) target = $region13
    $region12: #{tpu_custom_call.1} parent=1 // pred_region
      %44 = vsyncadd [#allocation8], 0
      %s45 = sshll.u32 %s2, 4
      %s46 = int_to_ptr.hbm [resolvable:$true] %s45
      %s47 = sshll.u32 [#allocation9], 4
      %s48 = int_to_ptr.vmem [resolvable:$true] %s47
      %53 = dma.hbm_to_vmem [thread:$0]  %s46, 8192, %s48, [#allocation8], 256, 256, 16
    $region13: #{tpu_custom_call.1} parent=1 // pred_fallthru
      _
    // Predicated region
    $region14: #{tpu_custom_call.1} parent=1 // pred_check
      _
    $region15: #{tpu_custom_call.1} parent=1 // pred_check_branch
      %55 = sbr.rel (0) target = $region17
    $region16: #{tpu_custom_call.1} parent=1 // pred_region
      %57 = vsyncadd [#allocation11], 0
      %s58 = sshll.u32 %s3, 4
      %s59 = int_to_ptr.hbm [resolvable:$true] %s58
      %s60 = sshll.u32 [#allocation10], 4
      %s61 = int_to_ptr.vmem [resolvable:$true] %s60
      %66 = dma.hbm_to_vmem [thread:$0]  %s59, 4096, %s61, [#allocation11], 256, 256, 16
    $region17: #{tpu_custom_call.1} parent=1 // pred_fallthru
      _
    // Predicated region
    $region18: #{tpu_custom_call.1} parent=1 // pred_check
      _
    $region19: #{tpu_custom_call.1} parent=1 // pred_check_branch
      %68 = sbr.rel (0) target = $region21
    $region20: #{tpu_custom_call.1} parent=1 // pred_region
      %70 = vsyncadd [#allocation11], 0
      %s72 = sshll.u32 %s4, 4
      %s73 = int_to_ptr.hbm [resolvable:$true] %s72
      %s74 = sshll.u32 [#allocation12], 4
      %s75 = int_to_ptr.vmem [resolvable:$true] %s74
      %77 = dma.hbm_to_vmem [thread:$0]  %s73, 64, %s75, [#allocation11]
    $region21: #{tpu_custom_call.1} parent=1 // pred_fallthru
      _
    // Predicated region
    $region22: #{tpu_custom_call.1} parent=1 // pred_check
      _
    $region23: #{tpu_custom_call.1} parent=1 // pred_check_branch
      %79 = sbr.rel (0) target = $region25
    $region24: #{tpu_custom_call.1} parent=1 // pred_region
      %81 = vsyncadd [#allocation14], 0
      %s82 = sshll.u32 %s5, 4
      %s83 = int_to_ptr.hbm [resolvable:$true] %s82
      %s84 = sshll.u32 [#allocation13], 4
      %s85 = int_to_ptr.vmem [resolvable:$true] %s84
      %90 = dma.hbm_to_vmem [thread:$0]  %s83, 1024, %s85, [#allocation14], 64, 64, 4
    $region25: #{tpu_custom_call.1} parent=1 // pred_fallthru
      _
    // Predicated region
    $region26: #{tpu_custom_call.1} parent=1 // pred_check
      _
    $region27: #{tpu_custom_call.1} parent=1 // pred_check_branch
      %92 = sbr.rel (0) target = $region29
    $region28: #{tpu_custom_call.1} parent=1 // pred_region
      _
    $region29: #{tpu_custom_call.1} parent=1 // pred_fallthru
      _
    // Predicated region
    $region30: #{tpu_custom_call.1} parent=1 // pred_check
      _
    $region31: #{tpu_custom_call.1} parent=1 // pred_check_branch
      %94 = sbr.rel (0) target = $region33
    $region32: #{tpu_custom_call.1} parent=1 // pred_region
      %96 = dma.done [#allocation5], 4096
    $region33: #{tpu_custom_call.1} parent=1 // pred_fallthru
      _
    // Predicated region
    $region34: #{tpu_custom_call.1} parent=1 // pred_check
      _
    $region35: #{tpu_custom_call.1} parent=1 // pred_check_branch
      %98 = sbr.rel (0) target = $region37
    $region36: #{tpu_custom_call.1} parent=1 // pred_region
      %100 = dma.done [#allocation8], 64
    $region37: #{tpu_custom_call.1} parent=1 // pred_fallthru
      _
    // Predicated region
    $region38: #{tpu_custom_call.1} parent=1 // pred_check
      _
    $region39: #{tpu_custom_call.1} parent=1 // pred_check_branch
      %102 = sbr.rel (0) target = $region41
    $region40: #{tpu_custom_call.1} parent=1 // pred_region
      %104 = dma.done [#allocation8], 8192
    $region41: #{tpu_custom_call.1} parent=1 // pred_fallthru
      _
    // Predicated region
    $region42: #{tpu_custom_call.1} parent=1 // pred_check
      _
    $region43: #{tpu_custom_call.1} parent=1 // pred_check_branch
      %106 = sbr.rel (0) target = $region45
    $region44: #{tpu_custom_call.1} parent=1 // pred_region
      %108 = dma.done [#allocation11], 4096
    $region45: #{tpu_custom_call.1} parent=1 // pred_fallthru
      _
    // Predicated region
    $region46: #{tpu_custom_call.1} parent=1 // pred_check
      _
    $region47: #{tpu_custom_call.1} parent=1 // pred_check_branch
      %110 = sbr.rel (0) target = $region49
    $region48: #{tpu_custom_call.1} parent=1 // pred_region
      %112 = dma.done [#allocation11], 64
    $region49: #{tpu_custom_call.1} parent=1 // pred_fallthru
      _
    // Predicated region
    $region50: #{tpu_custom_call.1} parent=1 // pred_check
      _
    $region51: #{tpu_custom_call.1} parent=1 // pred_check_branch
      %114 = sbr.rel (0) target = $region53
    $region52: #{tpu_custom_call.1} parent=1 // pred_region
      %116 = dma.done [#allocation14], 1024
    $region53: #{tpu_custom_call.1} parent=1 // pred_fallthru
      _
    %p117 = scmp.eq.s32.totalorder 0, 0
    // Predicated region
    $region54: #{tpu_custom_call.1} parent=1 // pred_check
      %p118 = pneg %p117
    $region55: #{tpu_custom_call.1} parent=1 // pred_check_branch
      %120 = sbr.rel (%p118) target = $region57
    $region56: #{tpu_custom_call.1} parent=1 // pred_region
      %121 = vst [vmem:[#allocation2] sm:$0xff] 0.0
      %122 = vst [vmem:[#allocation2 + $0x8] sm:$0xff] 0.0
      %123 = vst [vmem:[#allocation3] sm:$0xff] 0.0
      %124 = vst [vmem:[#allocation3 + $0x8] sm:$0xff] 0.0
    $region57: #{tpu_custom_call.1} parent=1 // pred_fallthru
      _
    %v125 = vld [vmem:[#allocation2] sm:$0xff]
    %s126 = scalar_lea.vmem [#allocation2], 8
    %v127 = vld [vmem:[%s126] sm:$0xff]
    %v128 = vld [vmem:[#allocation3] sm:$0xff]
    %s129 = scalar_lea.vmem [#allocation3], 8
    %v130 = vld [vmem:[%s129] sm:$0xff]
    loop: start=0, step=1, limit=8
    $region58: #{tpu_custom_call.1} parent=1 // loop_pre_header
      _
    $region59: #{tpu_custom_call.1} parent=1 // loop_header
      %s132 = sphi 0, %s136
      %p133 = scmp.ge.s32.totalorder %s132, 8
      %v137 = vphi %v125, %v473
      %v138 = vphi %v127, %v1045
      %v139 = vphi %v128, %v471
      %v140 = vphi %v130, %v1043
    $region60: #{tpu_custom_call.1} parent=1 // loop_header_branch
      %135 = sbr.rel (%p133) target = $region64
    $region61: #{tpu_custom_call.1} parent=1 // loop_body
      %s141 = smul.u32 %s132, 4
      %s142 = smul.addr %s141, 8
      %s143 = scalar_lea.vmem [#allocation4], %s142
      %v144 = vld [vmem:[%s143] sm:$0xff]
      %v145 = vld [vmem:[%s143 + $0x8] sm:$0xff]
      %v146 = vld [vmem:[%s143 + $0x10] sm:$0xff]
      %v147 = vld [vmem:[%s143 + $0x18] sm:$0xff]
      %v148 = vld [vmem:[#allocation7] sm:$0xf]
      %v150 = vperm.slane %v148, 0
      %v151 = vperm.slane %v148, 1
      %v152 = vperm.slane %v148, 2
      %v153 = vperm.slane %v148, 3
      %v158 = vadd.f32 %v144, %v150
      %v159 = vadd.f32 %v145, %v151
      %v160 = vadd.f32 %v146, %v152
      %v161 = vadd.f32 %v147, %v153
      %v162 = vpack.c.bf16 %v137, %v137
      %v163 = vld [vmem:[#allocation9] sm:$0xff]
      %v164 = vld [vmem:[#allocation9 + $0x8] sm:$0xff]
      %v165 = vld [vmem:[#allocation9 + $0x10] sm:$0xff]
      %v166 = vld [vmem:[#allocation9 + $0x18] sm:$0xff]
      %v167 = vld [vmem:[#allocation9 + $0x20] sm:$0xff]
      %v168 = vld [vmem:[#allocation9 + $0x28] sm:$0xff]
      %v169 = vld [vmem:[#allocation9 + $0x30] sm:$0xff]
      %v170 = vld [vmem:[#allocation9 + $0x38] sm:$0xff]
      %v171 = vld [vmem:[#allocation9 + $0x40] sm:$0xff]
      %v172 = vld [vmem:[#allocation9 + $0x48] sm:$0xff]
      %v173 = vld [vmem:[#allocation9 + $0x50] sm:$0xff]
      %v174 = vld [vmem:[#allocation9 + $0x58] sm:$0xff]
      %v175 = vld [vmem:[#allocation9 + $0x60] sm:$0xff]
      %v176 = vld [vmem:[#allocation9 + $0x68] sm:$0xff]
      %v177 = vld [vmem:[#allocation9 + $0x70] sm:$0xff]
      %v178 = vld [vmem:[#allocation9 + $0x78] sm:$0xff]
      %v179 = vld [vmem:[#allocation9 + $0x80] sm:$0xff]
      %v180 = vld [vmem:[#allocation9 + $0x88] sm:$0xff]
      %v181 = vld [vmem:[#allocation9 + $0x90] sm:$0xff]
      %v182 = vld [vmem:[#allocation9 + $0x98] sm:$0xff]
      %v183 = vld [vmem:[#allocation9 + $0xa0] sm:$0xff]
      %v184 = vld [vmem:[#allocation9 + $0xa8] sm:$0xff]
      %v185 = vld [vmem:[#allocation9 + $0xb0] sm:$0xff]
      %v186 = vld [vmem:[#allocation9 + $0xb8] sm:$0xff]
      %v187 = vld [vmem:[#allocation9 + $0xc0] sm:$0xff]
      %v188 = vld [vmem:[#allocation9 + $0xc8] sm:$0xff]
      %v189 = vld [vmem:[#allocation9 + $0xd0] sm:$0xff]
      %v190 = vld [vmem:[#allocation9 + $0xd8] sm:$0xff]
      %v191 = vld [vmem:[#allocation9 + $0xe0] sm:$0xff]
      %v192 = vld [vmem:[#allocation9 + $0xe8] sm:$0xff]
      %v193 = vld [vmem:[#allocation9 + $0xf0] sm:$0xff]
      %v194 = vld [vmem:[#allocation9 + $0xf8] sm:$0xff]
      %v227 = vunpack.c.l.b16 %v163
      %v228 = vunpack.c.h.b16 %v163
      %v229 = vunpack.c.l.b16 %v164
      %v230 = vunpack.c.h.b16 %v164
      %v231 = vunpack.c.l.b16 %v165
      %v232 = vunpack.c.h.b16 %v165
      %v233 = vunpack.c.l.b16 %v166
      %v234 = vunpack.c.h.b16 %v166
      %v235 = vunpack.c.l.b16 %v167
      %v236 = vunpack.c.h.b16 %v167
      %v237 = vunpack.c.l.b16 %v168
      %v238 = vunpack.c.h.b16 %v168
      %v239 = vunpack.c.l.b16 %v169
      %v240 = vunpack.c.h.b16 %v169
      %v241 = vunpack.c.l.b16 %v170
      %v242 = vunpack.c.h.b16 %v170
      %v243 = vunpack.c.l.b16 %v171
      %v244 = vunpack.c.h.b16 %v171
      %v245 = vunpack.c.l.b16 %v172
      %v246 = vunpack.c.h.b16 %v172
      %v247 = vunpack.c.l.b16 %v173
      %v248 = vunpack.c.h.b16 %v173
      %v249 = vunpack.c.l.b16 %v174
      %v250 = vunpack.c.h.b16 %v174
      %v251 = vunpack.c.l.b16 %v175
      %v252 = vunpack.c.h.b16 %v175
      %v253 = vunpack.c.l.b16 %v176
      %v254 = vunpack.c.h.b16 %v176
      %v255 = vunpack.c.l.b16 %v177
      %v256 = vunpack.c.h.b16 %v177
      %v257 = vunpack.c.l.b16 %v178
      %v258 = vunpack.c.h.b16 %v178
      %v259 = vunpack.c.l.b16 %v179
      %v260 = vunpack.c.h.b16 %v179
      %v261 = vunpack.c.l.b16 %v180
      %v262 = vunpack.c.h.b16 %v180
      %v263 = vunpack.c.l.b16 %v181
      %v264 = vunpack.c.h.b16 %v181
      %v265 = vunpack.c.l.b16 %v182
      %v266 = vunpack.c.h.b16 %v182
      %v267 = vunpack.c.l.b16 %v183
      %v268 = vunpack.c.h.b16 %v183
      %v269 = vunpack.c.l.b16 %v184
      %v270 = vunpack.c.h.b16 %v184
      %v271 = vunpack.c.l.b16 %v185
      %v272 = vunpack.c.h.b16 %v185
      %v273 = vunpack.c.l.b16 %v186
      %v274 = vunpack.c.h.b16 %v186
      %v275 = vunpack.c.l.b16 %v187
      %v276 = vunpack.c.h.b16 %v187
      %v277 = vunpack.c.l.b16 %v188
      %v278 = vunpack.c.h.b16 %v188
      %v279 = vunpack.c.l.b16 %v189
      %v280 = vunpack.c.h.b16 %v189
      %v281 = vunpack.c.l.b16 %v190
      %v282 = vunpack.c.h.b16 %v190
      %v283 = vunpack.c.l.b16 %v191
      %v284 = vunpack.c.h.b16 %v191
      %v285 = vunpack.c.l.b16 %v192
      %v286 = vunpack.c.h.b16 %v192
      %v287 = vunpack.c.l.b16 %v193
      %v288 = vunpack.c.h.b16 %v193
      %v289 = vunpack.c.l.b16 %v194
      %v290 = vunpack.c.h.b16 %v194
      %v291 = vpack.c.b16 %v231, %v227
      %v292 = vpack.c.b16 %v232, %v228
      %v293 = vpack.c.b16 %v233, %v229
      %v294 = vpack.c.b16 %v234, %v230
      %v295 = vpack.c.b16 %v239, %v235
      %v296 = vpack.c.b16 %v240, %v236
      %v297 = vpack.c.b16 %v241, %v237
      %v298 = vpack.c.b16 %v242, %v238
      %v299 = vpack.c.b16 %v247, %v243
      %v300 = vpack.c.b16 %v248, %v244
      %v301 = vpack.c.b16 %v249, %v245
      %v302 = vpack.c.b16 %v250, %v246
      %v303 = vpack.c.b16 %v255, %v251
      %v304 = vpack.c.b16 %v256, %v252
      %v305 = vpack.c.b16 %v257, %v253
      %v306 = vpack.c.b16 %v258, %v254
      %v307 = vpack.c.b16 %v263, %v259
      %v308 = vpack.c.b16 %v264, %v260
      %v309 = vpack.c.b16 %v265, %v261
      %v310 = vpack.c.b16 %v266, %v262
      %v311 = vpack.c.b16 %v271, %v267
      %v312 = vpack.c.b16 %v272, %v268
      %v313 = vpack.c.b16 %v273, %v269
      %v314 = vpack.c.b16 %v274, %v270
      %v315 = vpack.c.b16 %v279, %v275
      %v316 = vpack.c.b16 %v280, %v276
      %v317 = vpack.c.b16 %v281, %v277
      %v318 = vpack.c.b16 %v282, %v278
      %v319 = vpack.c.b16 %v287, %v283
      %v320 = vpack.c.b16 %v288, %v284
      %v321 = vpack.c.b16 %v289, %v285
      %v322 = vpack.c.b16 %v290, %v286
      %355 = vmatpush.bf16.msra.mxu0 %v319
      %356 = vmatpush.bf16.msra.mxu0 %v315
      %357 = vmatpush.bf16.msra.mxu0 %v311
      %358 = vmatpush.bf16.msra.mxu0 %v307
      %359 = vmatpush.bf16.msra.mxu0 %v303
      %360 = vmatpush.bf16.msra.mxu0 %v299
      %361 = vmatpush.bf16.msra.mxu0 %v295
      %362 = vmatpush.bf16.msra.mxu0 %v291
      %363 = vmatmul.bf16.gmra.mxu0 %v162
      %v364 = vpop.f32.mrf.mxu0
      %v365 = vadd.f32 0.0, %v364
      %v366 = vpop.f32.mrf.mxu0
      %367 = vdwg.mxu0
      %368 = vmatpush.bf16.msra.mxu0 %v320
      %369 = vmatpush.bf16.msra.mxu0 %v316
      %370 = vmatpush.bf16.msra.mxu0 %v312
      %371 = vmatpush.bf16.msra.mxu0 %v308
      %372 = vmatpush.bf16.msra.mxu0 %v304
      %373 = vmatpush.bf16.msra.mxu0 %v300
      %374 = vmatpush.bf16.msra.mxu0 %v296
      %375 = vmatpush.bf16.msra.mxu0 %v292
      %376 = vmatmul.bf16.gmra.mxu0 %v162
      %v377 = vpop.f32.mrf.mxu0
      %v378 = vadd.f32 0.0, %v377
      %v379 = vpop.f32.mrf.mxu0
      %380 = vdwg.mxu0
      %381 = vmatpush.bf16.msra.mxu0 %v321
      %382 = vmatpush.bf16.msra.mxu0 %v317
      %383 = vmatpush.bf16.msra.mxu0 %v313
      %384 = vmatpush.bf16.msra.mxu0 %v309
      %385 = vmatpush.bf16.msra.mxu0 %v305
      %386 = vmatpush.bf16.msra.mxu0 %v301
      %387 = vmatpush.bf16.msra.mxu0 %v297
      %388 = vmatpush.bf16.msra.mxu0 %v293
      %389 = vmatmul.bf16.gmra.mxu0 %v162
      %v390 = vpop.f32.mrf.mxu0
      %v391 = vadd.f32 0.0, %v390
      %v392 = vpop.f32.mrf.mxu0
      %393 = vdwg.mxu0
      %394 = vmatpush.bf16.msra.mxu0 %v322
      %395 = vmatpush.bf16.msra.mxu0 %v318
      %396 = vmatpush.bf16.msra.mxu0 %v314
      %397 = vmatpush.bf16.msra.mxu0 %v310
      %398 = vmatpush.bf16.msra.mxu0 %v306
      %399 = vmatpush.bf16.msra.mxu0 %v302
      %400 = vmatpush.bf16.msra.mxu0 %v298
      %401 = vmatpush.bf16.msra.mxu0 %v294
      %402 = vmatmul.bf16.gmra.mxu0 %v162
      %v403 = vpop.f32.mrf.mxu0
      %v404 = vadd.f32 0.0, %v403
      %v405 = vpop.f32.mrf.mxu0
      %406 = vdwg.mxu0
      %v407 = vadd.f32 %v158, %v365
      %v408 = vadd.f32 %v159, %v378
      %v409 = vadd.f32 %v160, %v391
      %v410 = vadd.f32 %v161, %v404
      %v411 = vxor.u32 %v407, 2147483648
      %v412 = vmul.f32 %v411, 1.442695
      %v413 = vpow.pop %v412
      %v414 = vadd.f32 %v413, 1.0
      %v415 = vrcp.pop %v414
      %v416 = vmul.f32 %v414, %v415
      %v417 = vsub.f32 1.0, %v416
      %v418 = vmul.f32 %v415, %v417
      %v419 = vadd.f32 %v415, %v418
      %vm420 = vweird.f32 %v414
      %vm421 = vweird.f32 %v415
      %vm422 = vmor %vm420, %vm421
      %v423 = vsel %vm422, %v415, %v419
      %v424 = vand.u32 2147483647, %v414
      %vm425 = vcmp.eq.f32.partialorder %v424, 8.507059e+37
      %v426 = vand.u32 %v414, 2147483648
      %v427 = vor.u32 1.1754944e-38, %v426
      %v428 = vsel %vm425, %v427, %v423
      %v429 = vmul.f32 1.0, %v428
      %v430 = vxor.u32 %v408, 2147483648
      %v431 = vmul.f32 %v430, 1.442695
      %v432 = vpow.pop %v431
      %v433 = vadd.f32 %v432, 1.0
      %v434 = vrcp.pop %v433
      %v435 = vmul.f32 %v433, %v434
      %v436 = vsub.f32 1.0, %v435
      %v437 = vmul.f32 %v434, %v436
      %v438 = vadd.f32 %v434, %v437
      %vm439 = vweird.f32 %v433
      %vm440 = vweird.f32 %v434
      %vm441 = vmor %vm439, %vm440
      %v442 = vsel %vm441, %v434, %v438
      %v443 = vand.u32 2147483647, %v433
      %vm444 = vcmp.eq.f32.partialorder %v443, 8.507059e+37
      %v445 = vand.u32 %v433, 2147483648
      %v446 = vor.u32 1.1754944e-38, %v445
      %v447 = vsel %vm444, %v446, %v442
      %v448 = vmul.f32 1.0, %v447
      %v449 = vtanh.pop %v409
      %v450 = vxor.u32 %v410, 2147483648
      %v451 = vmul.f32 %v450, 1.442695
      %v452 = vpow.pop %v451
      %v453 = vadd.f32 %v452, 1.0
      %v454 = vrcp.pop %v453
      %v455 = vmul.f32 %v453, %v454
      %v456 = vsub.f32 1.0, %v455
      %v457 = vmul.f32 %v454, %v456
      %v458 = vadd.f32 %v454, %v457
      %vm459 = vweird.f32 %v453
      %vm460 = vweird.f32 %v454
      %vm461 = vmor %vm459, %vm460
      %v462 = vsel %vm461, %v454, %v458
      %v463 = vand.u32 2147483647, %v453
      %vm464 = vcmp.eq.f32.partialorder %v463, 8.507059e+37
      %v465 = vand.u32 %v453, 2147483648
      %v466 = vor.u32 1.1754944e-38, %v465
      %v467 = vsel %vm464, %v466, %v462
      %v468 = vmul.f32 1.0, %v467
      %v469 = vmul.f32 %v448, %v139
      %v470 = vmul.f32 %v429, %v449
      %v471 = vadd.f32 %v469, %v470
      %v472 = vtanh.pop %v471
      %v473 = vmul.f32 %v468, %v472
      %v474 = vld [vmem:[#allocation12] sm:$0xf]
      %v475 = vpack.c.bf16 %v473, %v473
      %v476 = vld [vmem:[#allocation10] sm:$0xff]
      %v477 = vld [vmem:[#allocation10 + $0x8] sm:$0xff]
      %v478 = vld [vmem:[#allocation10 + $0x10] sm:$0xff]
      %v479 = vld [vmem:[#allocation10 + $0x18] sm:$0xff]
      %v480 = vld [vmem:[#allocation10 + $0x20] sm:$0xff]
      %v481 = vld [vmem:[#allocation10 + $0x28] sm:$0xff]
      %v482 = vld [vmem:[#allocation10 + $0x30] sm:$0xff]
      %v483 = vld [vmem:[#allocation10 + $0x38] sm:$0xff]
      %v484 = vld [vmem:[#allocation10 + $0x40] sm:$0xff]
      %v485 = vld [vmem:[#allocation10 + $0x48] sm:$0xff]
      %v486 = vld [vmem:[#allocation10 + $0x50] sm:$0xff]
      %v487 = vld [vmem:[#allocation10 + $0x58] sm:$0xff]
      %v488 = vld [vmem:[#allocation10 + $0x60] sm:$0xff]
      %v489 = vld [vmem:[#allocation10 + $0x68] sm:$0xff]
      %v490 = vld [vmem:[#allocation10 + $0x70] sm:$0xff]
      %v491 = vld [vmem:[#allocation10 + $0x78] sm:$0xff]
      %v492 = vld [vmem:[#allocation10 + $0x80] sm:$0xff]
      %v493 = vld [vmem:[#allocation10 + $0x88] sm:$0xff]
      %v494 = vld [vmem:[#allocation10 + $0x90] sm:$0xff]
      %v495 = vld [vmem:[#allocation10 + $0x98] sm:$0xff]
      %v496 = vld [vmem:[#allocation10 + $0xa0] sm:$0xff]
      %v497 = vld [vmem:[#allocation10 + $0xa8] sm:$0xff]
      %v498 = vld [vmem:[#allocation10 + $0xb0] sm:$0xff]
      %v499 = vld [vmem:[#allocation10 + $0xb8] sm:$0xff]
      %v500 = vld [vmem:[#allocation10 + $0xc0] sm:$0xff]
      %v501 = vld [vmem:[#allocation10 + $0xc8] sm:$0xff]
      %v502 = vld [vmem:[#allocation10 + $0xd0] sm:$0xff]
      %v503 = vld [vmem:[#allocation10 + $0xd8] sm:$0xff]
      %v504 = vld [vmem:[#allocation10 + $0xe0] sm:$0xff]
      %v505 = vld [vmem:[#allocation10 + $0xe8] sm:$0xff]
      %v506 = vld [vmem:[#allocation10 + $0xf0] sm:$0xff]
      %v507 = vld [vmem:[#allocation10 + $0xf8] sm:$0xff]
      %v540 = vunpack.c.l.b16 %v476
      %v541 = vunpack.c.h.b16 %v476
      %v542 = vunpack.c.l.b16 %v477
      %v543 = vunpack.c.h.b16 %v477
      %v544 = vunpack.c.l.b16 %v478
      %v545 = vunpack.c.h.b16 %v478
      %v546 = vunpack.c.l.b16 %v479
      %v547 = vunpack.c.h.b16 %v479
      %v548 = vunpack.c.l.b16 %v480
      %v549 = vunpack.c.h.b16 %v480
      %v550 = vunpack.c.l.b16 %v481
      %v551 = vunpack.c.h.b16 %v481
      %v552 = vunpack.c.l.b16 %v482
      %v553 = vunpack.c.h.b16 %v482
      %v554 = vunpack.c.l.b16 %v483
      %v555 = vunpack.c.h.b16 %v483
      %v556 = vunpack.c.l.b16 %v484
      %v557 = vunpack.c.h.b16 %v484
      %v558 = vunpack.c.l.b16 %v485
      %v559 = vunpack.c.h.b16 %v485
      %v560 = vunpack.c.l.b16 %v486
      %v561 = vunpack.c.h.b16 %v486
      %v562 = vunpack.c.l.b16 %v487
      %v563 = vunpack.c.h.b16 %v487
      %v564 = vunpack.c.l.b16 %v488
      %v565 = vunpack.c.h.b16 %v488
      %v566 = vunpack.c.l.b16 %v489
      %v567 = vunpack.c.h.b16 %v489
      %v568 = vunpack.c.l.b16 %v490
      %v569 = vunpack.c.h.b16 %v490
      %v570 = vunpack.c.l.b16 %v491
      %v571 = vunpack.c.h.b16 %v491
      %v572 = vunpack.c.l.b16 %v492
      %v573 = vunpack.c.h.b16 %v492
      %v574 = vunpack.c.l.b16 %v493
      %v575 = vunpack.c.h.b16 %v493
      %v576 = vunpack.c.l.b16 %v494
      %v577 = vunpack.c.h.b16 %v494
      %v578 = vunpack.c.l.b16 %v495
      %v579 = vunpack.c.h.b16 %v495
      %v580 = vunpack.c.l.b16 %v496
      %v581 = vunpack.c.h.b16 %v496
      %v582 = vunpack.c.l.b16 %v497
      %v583 = vunpack.c.h.b16 %v497
      %v584 = vunpack.c.l.b16 %v498
      %v585 = vunpack.c.h.b16 %v498
      %v586 = vunpack.c.l.b16 %v499
      %v587 = vunpack.c.h.b16 %v499
      %v588 = vunpack.c.l.b16 %v500
      %v589 = vunpack.c.h.b16 %v500
      %v590 = vunpack.c.l.b16 %v501
      %v591 = vunpack.c.h.b16 %v501
      %v592 = vunpack.c.l.b16 %v502
      %v593 = vunpack.c.h.b16 %v502
      %v594 = vunpack.c.l.b16 %v503
      %v595 = vunpack.c.h.b16 %v503
      %v596 = vunpack.c.l.b16 %v504
      %v597 = vunpack.c.h.b16 %v504
      %v598 = vunpack.c.l.b16 %v505
      %v599 = vunpack.c.h.b16 %v505
      %v600 = vunpack.c.l.b16 %v506
      %v601 = vunpack.c.h.b16 %v506
      %v602 = vunpack.c.l.b16 %v507
      %v603 = vunpack.c.h.b16 %v507
      %v604 = vpack.c.b16 %v544, %v540
      %v605 = vpack.c.b16 %v545, %v541
      %v606 = vpack.c.b16 %v546, %v542
      %v607 = vpack.c.b16 %v547, %v543
      %v608 = vpack.c.b16 %v552, %v548
      %v609 = vpack.c.b16 %v553, %v549
      %v610 = vpack.c.b16 %v554, %v550
      %v611 = vpack.c.b16 %v555, %v551
      %v612 = vpack.c.b16 %v560, %v556
      %v613 = vpack.c.b16 %v561, %v557
      %v614 = vpack.c.b16 %v562, %v558
      %v615 = vpack.c.b16 %v563, %v559
      %v616 = vpack.c.b16 %v568, %v564
      %v617 = vpack.c.b16 %v569, %v565
      %v618 = vpack.c.b16 %v570, %v566
      %v619 = vpack.c.b16 %v571, %v567
      %v620 = vpack.c.b16 %v576, %v572
      %v621 = vpack.c.b16 %v577, %v573
      %v622 = vpack.c.b16 %v578, %v574
      %v623 = vpack.c.b16 %v579, %v575
      %v624 = vpack.c.b16 %v584, %v580
      %v625 = vpack.c.b16 %v585, %v581
      %v626 = vpack.c.b16 %v586, %v582
      %v627 = vpack.c.b16 %v587, %v583
      %v628 = vpack.c.b16 %v592, %v588
      %v629 = vpack.c.b16 %v593, %v589
      %v630 = vpack.c.b16 %v594, %v590
      %v631 = vpack.c.b16 %v595, %v591
      %v632 = vpack.c.b16 %v600, %v596
      %v633 = vpack.c.b16 %v601, %v597
      %v634 = vpack.c.b16 %v602, %v598
      %v635 = vpack.c.b16 %v603, %v599
      %668 = vmatpush.bf16.msra.mxu0 %v632
      %669 = vmatpush.bf16.msra.mxu0 %v628
      %670 = vmatpush.bf16.msra.mxu0 %v624
      %671 = vmatpush.bf16.msra.mxu0 %v620
      %672 = vmatpush.bf16.msra.mxu0 %v616
      %673 = vmatpush.bf16.msra.mxu0 %v612
      %674 = vmatpush.bf16.msra.mxu0 %v608
      %675 = vmatpush.bf16.msra.mxu0 %v604
      %676 = vmatmul.bf16.gmra.mxu0 %v475
      %v677 = vpop.f32.mrf.mxu0
      %v678 = vadd.f32 0.0, %v677
      %v679 = vpop.f32.mrf.mxu0
      %680 = vdwg.mxu0
      %681 = vmatpush.bf16.msra.mxu0 %v633
      %682 = vmatpush.bf16.msra.mxu0 %v629
      %683 = vmatpush.bf16.msra.mxu0 %v625
      %684 = vmatpush.bf16.msra.mxu0 %v621
      %685 = vmatpush.bf16.msra.mxu0 %v617
      %686 = vmatpush.bf16.msra.mxu0 %v613
      %687 = vmatpush.bf16.msra.mxu0 %v609
      %688 = vmatpush.bf16.msra.mxu0 %v605
      %689 = vmatmul.bf16.gmra.mxu0 %v475
      %v690 = vpop.f32.mrf.mxu0
      %v691 = vadd.f32 0.0, %v690
      %v692 = vpop.f32.mrf.mxu0
      %693 = vdwg.mxu0
      %694 = vmatpush.bf16.msra.mxu0 %v634
      %695 = vmatpush.bf16.msra.mxu0 %v630
      %696 = vmatpush.bf16.msra.mxu0 %v626
      %697 = vmatpush.bf16.msra.mxu0 %v622
      %698 = vmatpush.bf16.msra.mxu0 %v618
      %699 = vmatpush.bf16.msra.mxu0 %v614
      %700 = vmatpush.bf16.msra.mxu0 %v610
      %701 = vmatpush.bf16.msra.mxu0 %v606
      %702 = vmatmul.bf16.gmra.mxu0 %v475
      %v703 = vpop.f32.mrf.mxu0
      %v704 = vadd.f32 0.0, %v703
      %v705 = vpop.f32.mrf.mxu0
      %706 = vdwg.mxu0
      %707 = vmatpush.bf16.msra.mxu0 %v635
      %708 = vmatpush.bf16.msra.mxu0 %v631
      %709 = vmatpush.bf16.msra.mxu0 %v627
      %710 = vmatpush.bf16.msra.mxu0 %v623
      %711 = vmatpush.bf16.msra.mxu0 %v619
      %712 = vmatpush.bf16.msra.mxu0 %v615
      %713 = vmatpush.bf16.msra.mxu0 %v611
      %714 = vmatpush.bf16.msra.mxu0 %v607
      %715 = vmatmul.bf16.gmra.mxu0 %v475
      %v716 = vpop.f32.mrf.mxu0
      %v717 = vadd.f32 0.0, %v716
      %v718 = vpop.f32.mrf.mxu0
      %719 = vdwg.mxu0
      %v721 = vperm.slane %v474, 0
      %v722 = vperm.slane %v474, 1
      %v723 = vperm.slane %v474, 2
      %v724 = vperm.slane %v474, 3
      %v729 = vadd.f32 %v721, %v678
      %v730 = vadd.f32 %v722, %v691
      %v731 = vadd.f32 %v723, %v704
      %v732 = vadd.f32 %v724, %v717
      %v733 = vpack.c.bf16 %v138, %v138
      %s734 = scalar_lea.vmem [#allocation9], 256
      %v735 = vld [vmem:[%s734] sm:$0xff]
      %v736 = vld [vmem:[%s734 + $0x8] sm:$0xff]
      %v737 = vld [vmem:[%s734 + $0x10] sm:$0xff]
      %v738 = vld [vmem:[%s734 + $0x18] sm:$0xff]
      %v739 = vld [vmem:[%s734 + $0x20] sm:$0xff]
      %v740 = vld [vmem:[%s734 + $0x28] sm:$0xff]
      %v741 = vld [vmem:[%s734 + $0x30] sm:$0xff]
      %v742 = vld [vmem:[%s734 + $0x38] sm:$0xff]
      %v743 = vld [vmem:[%s734 + $0x40] sm:$0xff]
      %v744 = vld [vmem:[%s734 + $0x48] sm:$0xff]
      %v745 = vld [vmem:[%s734 + $0x50] sm:$0xff]
      %v746 = vld [vmem:[%s734 + $0x58] sm:$0xff]
      %v747 = vld [vmem:[%s734 + $0x60] sm:$0xff]
      %v748 = vld [vmem:[%s734 + $0x68] sm:$0xff]
      %v749 = vld [vmem:[%s734 + $0x70] sm:$0xff]
      %v750 = vld [vmem:[%s734 + $0x78] sm:$0xff]
      %v751 = vld [vmem:[%s734 + $0x80] sm:$0xff]
      %v752 = vld [vmem:[%s734 + $0x88] sm:$0xff]
      %v753 = vld [vmem:[%s734 + $0x90] sm:$0xff]
      %v754 = vld [vmem:[%s734 + $0x98] sm:$0xff]
      %v755 = vld [vmem:[%s734 + $0xa0] sm:$0xff]
      %v756 = vld [vmem:[%s734 + $0xa8] sm:$0xff]
      %v757 = vld [vmem:[%s734 + $0xb0] sm:$0xff]
      %v758 = vld [vmem:[%s734 + $0xb8] sm:$0xff]
      %v759 = vld [vmem:[%s734 + $0xc0] sm:$0xff]
      %v760 = vld [vmem:[%s734 + $0xc8] sm:$0xff]
      %v761 = vld [vmem:[%s734 + $0xd0] sm:$0xff]
      %v762 = vld [vmem:[%s734 + $0xd8] sm:$0xff]
      %v763 = vld [vmem:[%s734 + $0xe0] sm:$0xff]
      %v764 = vld [vmem:[%s734 + $0xe8] sm:$0xff]
      %v765 = vld [vmem:[%s734 + $0xf0] sm:$0xff]
      %v766 = vld [vmem:[%s734 + $0xf8] sm:$0xff]
      %v799 = vunpack.c.l.b16 %v735
      %v800 = vunpack.c.h.b16 %v735
      %v801 = vunpack.c.l.b16 %v736
      %v802 = vunpack.c.h.b16 %v736
      %v803 = vunpack.c.l.b16 %v737
      %v804 = vunpack.c.h.b16 %v737
      %v805 = vunpack.c.l.b16 %v738
      %v806 = vunpack.c.h.b16 %v738
      %v807 = vunpack.c.l.b16 %v739
      %v808 = vunpack.c.h.b16 %v739
      %v809 = vunpack.c.l.b16 %v740
      %v810 = vunpack.c.h.b16 %v740
      %v811 = vunpack.c.l.b16 %v741
      %v812 = vunpack.c.h.b16 %v741
      %v813 = vunpack.c.l.b16 %v742
      %v814 = vunpack.c.h.b16 %v742
      %v815 = vunpack.c.l.b16 %v743
      %v816 = vunpack.c.h.b16 %v743
      %v817 = vunpack.c.l.b16 %v744
      %v818 = vunpack.c.h.b16 %v744
      %v819 = vunpack.c.l.b16 %v745
      %v820 = vunpack.c.h.b16 %v745
      %v821 = vunpack.c.l.b16 %v746
      %v822 = vunpack.c.h.b16 %v746
      %v823 = vunpack.c.l.b16 %v747
      %v824 = vunpack.c.h.b16 %v747
      %v825 = vunpack.c.l.b16 %v748
      %v826 = vunpack.c.h.b16 %v748
      %v827 = vunpack.c.l.b16 %v749
      %v828 = vunpack.c.h.b16 %v749
      %v829 = vunpack.c.l.b16 %v750
      %v830 = vunpack.c.h.b16 %v750
      %v831 = vunpack.c.l.b16 %v751
      %v832 = vunpack.c.h.b16 %v751
      %v833 = vunpack.c.l.b16 %v752
      %v834 = vunpack.c.h.b16 %v752
      %v835 = vunpack.c.l.b16 %v753
      %v836 = vunpack.c.h.b16 %v753
      %v837 = vunpack.c.l.b16 %v754
      %v838 = vunpack.c.h.b16 %v754
      %v839 = vunpack.c.l.b16 %v755
      %v840 = vunpack.c.h.b16 %v755
      %v841 = vunpack.c.l.b16 %v756
      %v842 = vunpack.c.h.b16 %v756
      %v843 = vunpack.c.l.b16 %v757
      %v844 = vunpack.c.h.b16 %v757
      %v845 = vunpack.c.l.b16 %v758
      %v846 = vunpack.c.h.b16 %v758
      %v847 = vunpack.c.l.b16 %v759
      %v848 = vunpack.c.h.b16 %v759
      %v849 = vunpack.c.l.b16 %v760
      %v850 = vunpack.c.h.b16 %v760
      %v851 = vunpack.c.l.b16 %v761
      %v852 = vunpack.c.h.b16 %v761
      %v853 = vunpack.c.l.b16 %v762
      %v854 = vunpack.c.h.b16 %v762
      %v855 = vunpack.c.l.b16 %v763
      %v856 = vunpack.c.h.b16 %v763
      %v857 = vunpack.c.l.b16 %v764
      %v858 = vunpack.c.h.b16 %v764
      %v859 = vunpack.c.l.b16 %v765
      %v860 = vunpack.c.h.b16 %v765
      %v861 = vunpack.c.l.b16 %v766
      %v862 = vunpack.c.h.b16 %v766
      %v863 = vpack.c.b16 %v803, %v799
      %v864 = vpack.c.b16 %v804, %v800
      %v865 = vpack.c.b16 %v805, %v801
      %v866 = vpack.c.b16 %v806, %v802
      %v867 = vpack.c.b16 %v811, %v807
      %v868 = vpack.c.b16 %v812, %v808
      %v869 = vpack.c.b16 %v813, %v809
      %v870 = vpack.c.b16 %v814, %v810
      %v871 = vpack.c.b16 %v819, %v815
      %v872 = vpack.c.b16 %v820, %v816
      %v873 = vpack.c.b16 %v821, %v817
      %v874 = vpack.c.b16 %v822, %v818
      %v875 = vpack.c.b16 %v827, %v823
      %v876 = vpack.c.b16 %v828, %v824
      %v877 = vpack.c.b16 %v829, %v825
      %v878 = vpack.c.b16 %v830, %v826
      %v879 = vpack.c.b16 %v835, %v831
      %v880 = vpack.c.b16 %v836, %v832
      %v881 = vpack.c.b16 %v837, %v833
      %v882 = vpack.c.b16 %v838, %v834
      %v883 = vpack.c.b16 %v843, %v839
      %v884 = vpack.c.b16 %v844, %v840
      %v885 = vpack.c.b16 %v845, %v841
      %v886 = vpack.c.b16 %v846, %v842
      %v887 = vpack.c.b16 %v851, %v847
      %v888 = vpack.c.b16 %v852, %v848
      %v889 = vpack.c.b16 %v853, %v849
      %v890 = vpack.c.b16 %v854, %v850
      %v891 = vpack.c.b16 %v859, %v855
      %v892 = vpack.c.b16 %v860, %v856
      %v893 = vpack.c.b16 %v861, %v857
      %v894 = vpack.c.b16 %v862, %v858
      %927 = vmatpush.bf16.msra.mxu0 %v891
      %928 = vmatpush.bf16.msra.mxu0 %v887
      %929 = vmatpush.bf16.msra.mxu0 %v883
      %930 = vmatpush.bf16.msra.mxu0 %v879
      %931 = vmatpush.bf16.msra.mxu0 %v875
      %932 = vmatpush.bf16.msra.mxu0 %v871
      %933 = vmatpush.bf16.msra.mxu0 %v867
      %934 = vmatpush.bf16.msra.mxu0 %v863
      %935 = vmatmul.bf16.gmra.mxu0 %v733
      %v936 = vpop.f32.mrf.mxu0
      %v937 = vadd.f32 0.0, %v936
      %v938 = vpop.f32.mrf.mxu0
      %939 = vdwg.mxu0
      %940 = vmatpush.bf16.msra.mxu0 %v892
      %941 = vmatpush.bf16.msra.mxu0 %v888
      %942 = vmatpush.bf16.msra.mxu0 %v884
      %943 = vmatpush.bf16.msra.mxu0 %v880
      %944 = vmatpush.bf16.msra.mxu0 %v876
      %945 = vmatpush.bf16.msra.mxu0 %v872
      %946 = vmatpush.bf16.msra.mxu0 %v868
      %947 = vmatpush.bf16.msra.mxu0 %v864
      %948 = vmatmul.bf16.gmra.mxu0 %v733
      %v949 = vpop.f32.mrf.mxu0
      %v950 = vadd.f32 0.0, %v949
      %v951 = vpop.f32.mrf.mxu0
      %952 = vdwg.mxu0
      %953 = vmatpush.bf16.msra.mxu0 %v893
      %954 = vmatpush.bf16.msra.mxu0 %v889
      %955 = vmatpush.bf16.msra.mxu0 %v885
      %956 = vmatpush.bf16.msra.mxu0 %v881
      %957 = vmatpush.bf16.msra.mxu0 %v877
      %958 = vmatpush.bf16.msra.mxu0 %v873
      %959 = vmatpush.bf16.msra.mxu0 %v869
      %960 = vmatpush.bf16.msra.mxu0 %v865
      %961 = vmatmul.bf16.gmra.mxu0 %v733
      %v962 = vpop.f32.mrf.mxu0
      %v963 = vadd.f32 0.0, %v962
      %v964 = vpop.f32.mrf.mxu0
      %965 = vdwg.mxu0
      %966 = vmatpush.bf16.msra.mxu0 %v894
      %967 = vmatpush.bf16.msra.mxu0 %v890
      %968 = vmatpush.bf16.msra.mxu0 %v886
      %969 = vmatpush.bf16.msra.mxu0 %v882
      %970 = vmatpush.bf16.msra.mxu0 %v878
      %971 = vmatpush.bf16.msra.mxu0 %v874
      %972 = vmatpush.bf16.msra.mxu0 %v870
      %973 = vmatpush.bf16.msra.mxu0 %v866
      %974 = vmatmul.bf16.gmra.mxu0 %v733
      %v975 = vpop.f32.mrf.mxu0
      %v976 = vadd.f32 0.0, %v975
      %v977 = vpop.f32.mrf.mxu0
      %978 = vdwg.mxu0
      %v979 = vadd.f32 %v729, %v937
      %v980 = vadd.f32 %v730, %v950
      %v981 = vadd.f32 %v731, %v963
      %v982 = vadd.f32 %v732, %v976
      %v983 = vxor.u32 %v979, 2147483648
      %v984 = vmul.f32 %v983, 1.442695
      %v985 = vpow.pop %v984
      %v986 = vadd.f32 %v985, 1.0
      %v987 = vrcp.pop %v986
      %v988 = vmul.f32 %v986, %v987
      %v989 = vsub.f32 1.0, %v988
      %v990 = vmul.f32 %v987, %v989
      %v991 = vadd.f32 %v987, %v990
      %vm992 = vweird.f32 %v986
      %vm993 = vweird.f32 %v987
      %vm994 = vmor %vm992, %vm993
      %v995 = vsel %vm994, %v987, %v991
      %v996 = vand.u32 2147483647, %v986
      %vm997 = vcmp.eq.f32.partialorder %v996, 8.507059e+37
      %v998 = vand.u32 %v986, 2147483648
      %v999 = vor.u32 1.1754944e-38, %v998
      %v1000 = vsel %vm997, %v999, %v995
      %v1001 = vmul.f32 1.0, %v1000
      %v1002 = vxor.u32 %v980, 2147483648
      %v1003 = vmul.f32 %v1002, 1.442695
      %v1004 = vpow.pop %v1003
      %v1005 = vadd.f32 %v1004, 1.0
      %v1006 = vrcp.pop %v1005
      %v1007 = vmul.f32 %v1005, %v1006
      %v1008 = vsub.f32 1.0, %v1007
      %v1009 = vmul.f32 %v1006, %v1008
      %v1010 = vadd.f32 %v1006, %v1009
      %vm1011 = vweird.f32 %v1005
      %vm1012 = vweird.f32 %v1006
      %vm1013 = vmor %vm1011, %vm1012
      %v1014 = vsel %vm1013, %v1006, %v1010
      %v1015 = vand.u32 2147483647, %v1005
      %vm1016 = vcmp.eq.f32.partialorder %v1015, 8.507059e+37
      %v1017 = vand.u32 %v1005, 2147483648
      %v1018 = vor.u32 1.1754944e-38, %v1017
      %v1019 = vsel %vm1016, %v1018, %v1014
      %v1020 = vmul.f32 1.0, %v1019
      %v1021 = vtanh.pop %v981
      %v1022 = vxor.u32 %v982, 2147483648
      %v1023 = vmul.f32 %v1022, 1.442695
      %v1024 = vpow.pop %v1023
      %v1025 = vadd.f32 %v1024, 1.0
      %v1026 = vrcp.pop %v1025
      %v1027 = vmul.f32 %v1025, %v1026
      %v1028 = vsub.f32 1.0, %v1027
      %v1029 = vmul.f32 %v1026, %v1028
      %v1030 = vadd.f32 %v1026, %v1029
      %vm1031 = vweird.f32 %v1025
      %vm1032 = vweird.f32 %v1026
      %vm1033 = vmor %vm1031, %vm1032
      %v1034 = vsel %vm1033, %v1026, %v1030
      %v1035 = vand.u32 2147483647, %v1025
      %vm1036 = vcmp.eq.f32.partialorder %v1035, 8.507059e+37
      %v1037 = vand.u32 %v1025, 2147483648
      %v1038 = vor.u32 1.1754944e-38, %v1037
      %v1039 = vsel %vm1036, %v1038, %v1034
      %v1040 = vmul.f32 1.0, %v1039
      %v1041 = vmul.f32 %v1020, %v140
      %v1042 = vmul.f32 %v1001, %v1021
      %v1043 = vadd.f32 %v1041, %v1042
      %v1044 = vtanh.pop %v1043
      %v1045 = vmul.f32 %v1040, %v1044
    $region62: #{tpu_custom_call.1} parent=1 // loop_footer
      %s136 = sadd.s32 1, %s132
    $region63: #{tpu_custom_call.1} parent=1 // loop_footer_branch
      %131 = sbr.rel target = $region59
    $region64: #{tpu_custom_call.1} parent=1 // loop_exit
      _
    %1046 = vst [vmem:[#allocation2] sm:$0xff] %v137
    %1047 = vst [vmem:[#allocation3] sm:$0xff] %v139
    %1048 = vst [vmem:[%s126] sm:$0xff] %v138
    %1049 = vst [vmem:[%s129] sm:$0xff] %v140
    // Predicated region
    $region65: #{tpu_custom_call.1} parent=1 // pred_check
      %p1050 = pneg %p117
    $region66: #{tpu_custom_call.1} parent=1 // pred_check_branch
      %1052 = sbr.rel (%p1050) target = $region68
    $region67: #{tpu_custom_call.1} parent=1 // pred_region
      %v1053 = vpack.c.bf16 %v138, %v138
      %v1054 = vld [vmem:[#allocation13] sm:$0xf]
      %v1055 = vld [vmem:[#allocation13 + $0x4] sm:$0xf]
      %v1056 = vld [vmem:[#allocation13 + $0x8] sm:$0xf]
      %v1057 = vld [vmem:[#allocation13 + $0xc] sm:$0xf]
      %v1058 = vld [vmem:[#allocation13 + $0x10] sm:$0xf]
      %v1059 = vld [vmem:[#allocation13 + $0x14] sm:$0xf]
      %v1060 = vld [vmem:[#allocation13 + $0x18] sm:$0xf]
      %v1061 = vld [vmem:[#allocation13 + $0x1c] sm:$0xf]
      %v1062 = vld [vmem:[#allocation13 + $0x20] sm:$0xf]
      %v1063 = vld [vmem:[#allocation13 + $0x24] sm:$0xf]
      %v1064 = vld [vmem:[#allocation13 + $0x28] sm:$0xf]
      %v1065 = vld [vmem:[#allocation13 + $0x2c] sm:$0xf]
      %v1066 = vld [vmem:[#allocation13 + $0x30] sm:$0xf]
      %v1067 = vld [vmem:[#allocation13 + $0x34] sm:$0xf]
      %v1068 = vld [vmem:[#allocation13 + $0x38] sm:$0xf]
      %v1069 = vld [vmem:[#allocation13 + $0x3c] sm:$0xf]
      %v1070 = vld [vmem:[%s6] sm:$0x1]
      %v1072 = vperm.slane %v1070, 0
      %v1090 = vunpack.c.l.b16 %v1054
      %v1091 = vunpack.c.l.b16 %v1055
      %v1092 = vunpack.c.l.b16 %v1056
      %v1093 = vunpack.c.l.b16 %v1057
      %v1094 = vunpack.c.l.b16 %v1058
      %v1095 = vunpack.c.l.b16 %v1059
      %v1096 = vunpack.c.l.b16 %v1060
      %v1097 = vunpack.c.l.b16 %v1061
      %v1098 = vunpack.c.l.b16 %v1062
      %v1099 = vunpack.c.l.b16 %v1063
      %v1100 = vunpack.c.l.b16 %v1064
      %v1101 = vunpack.c.l.b16 %v1065
      %v1102 = vunpack.c.l.b16 %v1066
      %v1103 = vunpack.c.l.b16 %v1067
      %v1104 = vunpack.c.l.b16 %v1068
      %v1105 = vunpack.c.l.b16 %v1069
      %v1106 = vpack.c.b16 %v1091, %v1090
      %v1107 = vpack.c.b16 %v1093, %v1092
      %v1108 = vpack.c.b16 %v1095, %v1094
      %v1109 = vpack.c.b16 %v1097, %v1096
      %v1110 = vpack.c.b16 %v1099, %v1098
      %v1111 = vpack.c.b16 %v1101, %v1100
      %v1112 = vpack.c.b16 %v1103, %v1102
      %v1113 = vpack.c.b16 %v1105, %v1104
      %1122 = vmatpush.bf16.msra.mxu0 %v1113
      %1123 = vmatpush.bf16.msra.mxu0 %v1112
      %1124 = vmatpush.bf16.msra.mxu0 %v1111
      %1125 = vmatpush.bf16.msra.mxu0 %v1110
      %1126 = vmatpush.bf16.msra.mxu0 %v1109
      %1127 = vmatpush.bf16.msra.mxu0 %v1108
      %1128 = vmatpush.bf16.msra.mxu0 %v1107
      %1129 = vmatpush.bf16.msra.mxu0 %v1106
      %1130 = vmatmul.bf16.gmra.mxu0 %v1053
      %v1131 = vpop.f32.mrf.mxu0
      %v1132 = vadd.f32 %v1072, %v1131
      %v1133 = vpop.f32.mrf.mxu0
      %1134 = vdwg.mxu0
      %1135 = vst [vmem:[#allocation15] sm:$0xff] %v1132
    $region68: #{tpu_custom_call.1} parent=1 // pred_fallthru
      _
    // Predicated region
    $region69: #{tpu_custom_call.1} parent=1 // pred_check
      _
    $region70: #{tpu_custom_call.1} parent=1 // pred_check_branch
      %1137 = sbr.rel (0) target = $region72
    $region71: #{tpu_custom_call.1} parent=1 // pred_region
      %1139 = vsyncadd [#allocation6], 0
      %s1141 = sshll.u32 [#allocation15], 4
      %s1142 = int_to_ptr.vmem [resolvable:$true] %s1141
      %s1143 = sshll.u32 %s7, 4
      %s1144 = int_to_ptr.hbm [resolvable:$true] %s1143
      %1146 = dma.vmem_to_hbm [thread:$0]  %s1142, 128, %s1144, [#allocation6]
    $region72: #{tpu_custom_call.1} parent=1 // pred_fallthru
      _
    // Predicated region
    $region73: #{tpu_custom_call.1} parent=1 // pred_check
      _
    $region74: #{tpu_custom_call.1} parent=1 // pred_check_branch
      %1148 = sbr.rel (0) target = $region76
    $region75: #{tpu_custom_call.1} parent=1 // pred_region
      %1150 = dma.done [#allocation6], 128
    $region76: #{tpu_custom_call.1} parent=1 // pred_fallthru
      _
    %1151 = vsyncpa [#allocation5], 1
    %1152 = vsyncpa [#allocation8], 1
    %1153 = vsyncpa [#allocation11], 1
    %1154 = vsyncpa [#allocation14], 1
    %1155 = vsyncpa [#allocation6], 1

</llo_original>
